<compile_context>
chip_gen: v6e
topology: v6e:2x2x1
jax: 0.10.0
libtpu: 0.0.40
codegen_flags: <defaults>
</compile_context>

<pallas_src>
import math
import functools

import jax
import jax.numpy as jnp
from jax.experimental import pallas as pl
from jax.experimental.pallas import tpu as pltpu

NEG_INF = -1e9


# ----------------------------------------------------------------------------
# shared math helpers (used inside the Pallas kernels AND by the pure-JAX
# reference, so the numerical comparison is apples-to-apples)
# ----------------------------------------------------------------------------
def _layer_norm(x, gamma, beta, eps=1e-6):
    x = x.astype(jnp.float32)
    mean = jnp.mean(x, axis=-1, keepdims=True)
    var = jnp.mean(jnp.square(x - mean), axis=-1, keepdims=True)
    return (x - mean) * jax.lax.rsqrt(var + eps) * gamma + beta


def _project(x, w, b, cdt):
    return jnp.einsum('bsd,de->bse', x.astype(cdt), w.astype(cdt),
                      preferred_element_type=jnp.float32) + b


def _kv_math(x, memory, ln0_g, ln0_b,
             wk_s, bk_s, wv_s, bv_s, wk_c, bk_c, wv_c, bv_c, cdt):
    """Query-tile-invariant per-layer work: pre-LN of the full layer input and
    the self-/cross-attention K & V projections (computed once per layer)."""
    xn = _layer_norm(x, ln0_g, ln0_b).astype(cdt)
    k_s = _project(xn, wk_s, bk_s, cdt).astype(cdt)
    v_s = _project(xn, wv_s, bv_s, cdt).astype(cdt)
    k_c = _project(memory, wk_c, bk_c, cdt).astype(cdt)
    v_c = _project(memory, wv_c, bv_c, cdt).astype(cdt)
    return xn, k_s, v_s, k_c, v_c


def _attention(q_n, wq, bq, k, v, wo, bo, bias, num_heads, cdt, recip):
    """Multi-head attention with precomputed K/V.  `bias` is an additive mask
    (0 / -1e9) broadcastable to (B, Tq, Tk).  Per-head score/context matmuls
    feed a single (H, H) output projection (heads concatenated along lanes)."""
    B, Tq, H = q_n.shape
    hd = H // num_heads
    q = jnp.einsum('btd,de->bte', q_n.astype(cdt), wq.astype(cdt),
                   preferred_element_type=jnp.float32) + bq
    q = q * (1.0 / math.sqrt(hd))
    kc = k.astype(cdt)
    vc = v.astype(cdt)
    ctx = []
    for h in range(num_heads):
        sl = slice(h * hd, (h + 1) * hd)
        s = jnp.einsum('btd,bsd->bts', q[:, :, sl].astype(cdt), kc[:, :, sl],
                       preferred_element_type=jnp.float32)
        s = s + bias                                   # additive mask (hoisted select)
        m = jnp.max(s, axis=-1, keepdims=True)
        e = jnp.exp(s - m)
        a = e * recip(jnp.sum(e, axis=-1, keepdims=True))
        ctx.append(jnp.einsum('bts,bsd->btd', a.astype(cdt), vc[:, :, sl],
                              preferred_element_type=jnp.float32))
    ctx = jnp.concatenate(ctx, axis=-1)                # (B, Tq, H)
    return jnp.einsum('btd,de->bte', ctx.astype(cdt), wo.astype(cdt),
                      preferred_element_type=jnp.float32) + bo


# ----------------------------------------------------------------------------
# Pallas kernels
# ----------------------------------------------------------------------------
def _kv_kernel(x_ref, mem_ref, g_ref, b_ref, kvw_ref, kvb_ref,
               xn_ref, ks_ref, vs_ref, kc_ref, vc_ref):
    """Once per layer: pre-LN of x and K/V projections (self & cross)."""
    cdt = kvw_ref.dtype
    xn, ks, vs, kc, vc = _kv_math(
        x_ref[...], mem_ref[...], g_ref[...], b_ref[...],
        kvw_ref[0], kvb_ref[0:1], kvw_ref[1], kvb_ref[1:2],
        kvw_ref[2], kvb_ref[2:3], kvw_ref[3], kvb_ref[3:4], cdt)
    xn_ref[...] = xn
    ks_ref[...] = ks
    vs_ref[...] = vs
    kc_ref[...] = kc
    vc_ref[...] = vc


def _layer_kernel(num_heads, tq,
                  xq_ref, xnq_ref, ks_ref, vs_ref, kc_ref, vc_ref, sbias_ref,
                  aw_ref, ab_ref, lng_ref, lnb_ref,
                  w1_ref, b1_ref, w2_ref, b2_ref, out_ref):
    """Per-query-tile tail of a decoder layer (K/V already hoisted)."""
    cdt = aw_ref.dtype
    recip = lambda u: pl.reciprocal(u, approx=True)
    q0 = pl.program_id(0) * tq
    x_q = xq_ref[...]                                   # (B, tq, H) residual rows
    xn_q = xnq_ref[...]                                 # (B, tq, H) pre-LN rows (bf16)
    Tk = ks_ref.shape[1]

    # causal additive bias, built in-kernel (no (T,T) HBM traffic)
    row = jax.lax.broadcasted_iota(jnp.int32, (tq, Tk), 0) + q0
    col = jax.lax.broadcasted_iota(jnp.int32, (tq, Tk), 1)
    causal_bias = jnp.where(row >= col, 0.0, NEG_INF).astype(jnp.float32)[None]

    # masked self-attention (weights read at point of use)
    h1 = _attention(xn_q, aw_ref[0], ab_ref[0:1], ks_ref[...], vs_ref[...],
                    aw_ref[1], ab_ref[1:2], causal_bias,
                    num_heads, cdt, recip) + x_q

    # source-target cross attention (pre-LN on the query path only)
    h1n = _layer_norm(h1, lng_ref[0:1], lnb_ref[0:1])
    h2 = _attention(h1n, aw_ref[2], ab_ref[2:3], kc_ref[...], vc_ref[...],
                    aw_ref[3], ab_ref[3:4], sbias_ref[...],
                    num_heads, cdt, recip) + h1

    # position-wise feed-forward (own pre-LN + residual)
    f = _layer_norm(h2, lng_ref[1:2], lnb_ref[1:2])
    f = jnp.maximum(_project(f, w1_ref[...], b1_ref[...], cdt), 0.0)
    f = _project(f, w2_ref[...], b2_ref[...], cdt)
    out_ref[...] = (h2 + f).astype(out_ref.dtype)


def _final_lsm_kernel(x_ref, g_ref, b_ref, wout_ref, out_ref, xn_out_ref,
                      xn_scr, m_scr, l_scr, lse_scr):
    """Fused final LayerNorm + vocab projection + log-softmax.
    Grid (nq, 2, nv): sweep 0 = online logsumexp over vocab tiles,
    sweep 1 = recompute logits tile and write log-probs directly."""
    s = pl.program_id(1)
    v = pl.program_id(2)
    nv = pl.num_programs(2)

    @pl.when(jnp.logical_and(s == 0, v == 0))
    def _():
        xn = _layer_norm(x_ref[...], g_ref[...], b_ref[...])
        xn_out_ref[...] = xn.astype(xn_out_ref.dtype)   # f32 x_final output
        xn_scr[...] = xn.astype(xn_scr.dtype)           # bf16, reused for all v tiles
        m_scr[...] = jnp.full(m_scr.shape, -jnp.inf, jnp.float32)
        l_scr[...] = jnp.zeros(l_scr.shape, jnp.float32)

    logits = jnp.einsum('btd,dv->btv', xn_scr[...], wout_ref[...],
                        preferred_element_type=jnp.float32)

    @pl.when(s == 0)
    def _():
        m_prev = m_scr[...]
        m_new = jnp.maximum(m_prev, jnp.max(logits, axis=-1, keepdims=True))
        l_scr[...] = (l_scr[...] * jnp.exp(m_prev - m_new)
                      + jnp.sum(jnp.exp(logits - m_new), axis=-1, keepdims=True))
        m_scr[...] = m_new

    @pl.when(jnp.logical_and(s == 0, v == nv - 1))
    def _():
        lse_scr[...] = m_scr[...] + jnp.log(l_scr[...])

    @pl.when(s == 1)
    def _():
        out_ref[...] = logits - lse_scr[...]


def _final_logits_kernel(x_ref, g_ref, b_ref, wout_ref, out_ref, xn_out_ref,
                         xn_scr):
    """Final LayerNorm + vocab projection without log-softmax (4-D trg_mask)."""
    v = pl.program_id(1)

    @pl.when(v == 0)
    def _():
        xn = _layer_norm(x_ref[...], g_ref[...], b_ref[...])
        xn_out_ref[...] = xn.astype(xn_out_ref.dtype)
        xn_scr[...] = xn.astype(xn_scr.dtype)

    out_ref[...] = jnp.einsum('btd,dv->btv', xn_scr[...], wout_ref[...],
                              preferred_element_type=jnp.float32)


# ----------------------------------------------------------------------------
# pallas_call wrappers
# ----------------------------------------------------------------------------
@functools.lru_cache(maxsize=None)
def _vmem_limit_bytes():
    # Re-derive the scoped-VMEM budget per generation: ~physical minus 16 MiB
    # headroom, capped at 100 MiB (v5e/v6e 128 MiB phys -> 100, v7x 64 -> 48).
    try:
        cap = int(pltpu.get_tpu_info().vmem_capacity_bytes)
        if cap > 0:
            return int(max(32 * 1024 * 1024,
                           min(100 * 1024 * 1024, cap - 16 * 1024 * 1024)))
    except Exception:
        pass
    return 32 * 1024 * 1024


def _resident(arr):
    zeros = (0,) * arr.ndim
    return pl.BlockSpec(arr.shape, lambda *_: zeros)


def decoder_layer(x, memory, src_bias, lp, num_heads, tq, vmem_limit):
    B, T, H = x.shape
    S = memory.shape[1]
    cdt = lp['kv_w'].dtype

    # 1) query-tile-invariant work, exactly once per layer ---------------------
    xn, ks, vs, kc, vc = pl.pallas_call(
        _kv_kernel,
        out_shape=(jax.ShapeDtypeStruct((B, T, H), cdt),
                   jax.ShapeDtypeStruct((B, T, H), cdt),
                   jax.ShapeDtypeStruct((B, T, H), cdt),
                   jax.ShapeDtypeStruct((B, S, H), cdt),
                   jax.ShapeDtypeStruct((B, S, H), cdt)),
        compiler_params=pltpu.CompilerParams(vmem_limit_bytes=vmem_limit),
    )(x, memory, lp['ln0_g'], lp['ln0_b'], lp['kv_w'], lp['kv_b'])

    # 2) fused per-query-tile kernel -------------------------------------------
    nq = T // tq
    grid_spec = pltpu.PrefetchScalarGridSpec(
        num_scalar_prefetch=0,
        grid=(nq,),
        in_specs=[pl.BlockSpec((B, tq, H), lambda i: (0, i, 0)),  # x tile (residual)
                  pl.BlockSpec((B, tq, H), lambda i: (0, i, 0)),  # pre-LN x tile (query)
                  _resident(ks), _resident(vs), _resident(kc), _resident(vc),
                  _resident(src_bias),
                  _resident(lp['qo_w']), _resident(lp['qo_b']),
                  _resident(lp['ln_g']), _resident(lp['ln_b']),
                  _resident(lp['w1']), _resident(lp['b1']),
                  _resident(lp['w2']), _resident(lp['b2'])],
        out_specs=pl.BlockSpec((B, tq, H), lambda i: (0, i, 0)),
    )
    return pl.pallas_call(
        functools.partial(_layer_kernel, num_heads, tq),
        out_shape=jax.ShapeDtypeStruct((B, T, H), jnp.float32),
        grid_spec=grid_spec,
        compiler_params=pltpu.CompilerParams(
            dimension_semantics=("parallel",), vmem_limit_bytes=vmem_limit),
    )(x, xn, ks, vs, kc, vc, src_bias,
      lp['qo_w'], lp['qo_b'], lp['ln_g'], lp['ln_b'],
      lp['w1'], lp['b1'], lp['w2'], lp['b2'])


def final_projection_logsoftmax(x, ln_g, ln_b, w_out, tq, tv, vmem_limit):
    B, T, H = x.shape
    V = w_out.shape[-1]
    nq, nv = T // tq, V // tv
    grid_spec = pltpu.PrefetchScalarGridSpec(
        num_scalar_prefetch=0,
        grid=(nq, 2, nv),                       # (q tile, sweep, vocab tile)
        in_specs=[pl.BlockSpec((B, tq, H), lambda q, s, v: (0, q, 0)),
                  pl.BlockSpec((1, H), lambda q, s, v: (0, 0)),
                  pl.BlockSpec((1, H), lambda q, s, v: (0, 0)),
                  pl.BlockSpec((H, tv), lambda q, s, v: (0, v))],
        out_specs=(pl.BlockSpec((B, tq, tv), lambda q, s, v: (0, q, v * s)),
                   pl.BlockSpec((B, tq, H), lambda q, s, v: (0, q, 0))),
        scratch_shapes=[pltpu.VMEM((B, tq, H), w_out.dtype),   # cached LN(x) tile
                        pltpu.VMEM((B, tq, 1), jnp.float32),   # running max
                        pltpu.VMEM((B, tq, 1), jnp.float32),   # running sum
                        pltpu.VMEM((B, tq, 1), jnp.float32)],  # logsumexp
    )
    return pl.pallas_call(
        _final_lsm_kernel,
        out_shape=(jax.ShapeDtypeStruct((B, T, V), jnp.float32),
                   jax.ShapeDtypeStruct((B, T, H), jnp.float32)),
        grid_spec=grid_spec,
        compiler_params=pltpu.CompilerParams(
            dimension_semantics=("parallel", "arbitrary", "arbitrary"),
            vmem_limit_bytes=vmem_limit),
    )(x, ln_g, ln_b, w_out)


def final_projection_logits(x, ln_g, ln_b, w_out, tq, tv, vmem_limit):
    B, T, H = x.shape
    V = w_out.shape[-1]
    nq, nv = T // tq, V // tv
    grid_spec = pltpu.PrefetchScalarGridSpec(
        num_scalar_prefetch=0,
        grid=(nq, nv),
        in_specs=[pl.BlockSpec((B, tq, H), lambda q, v: (0, q, 0)),
                  pl.BlockSpec((1, H), lambda q, v: (0, 0)),
                  pl.BlockSpec((1, H), lambda q, v: (0, 0)),
                  pl.BlockSpec((H, tv), lambda q, v: (0, v))],
        out_specs=(pl.BlockSpec((B, tq, tv), lambda q, v: (0, q, v)),
                   pl.BlockSpec((B, tq, H), lambda q, v: (0, q, 0))),
        scratch_shapes=[pltpu.VMEM((B, tq, H), w_out.dtype)],
    )
    return pl.pallas_call(
        _final_logits_kernel,
        out_shape=(jax.ShapeDtypeStruct((B, T, V), jnp.float32),
                   jax.ShapeDtypeStruct((B, T, H), jnp.float32)),
        grid_spec=grid_spec,
        compiler_params=pltpu.CompilerParams(
            dimension_semantics=("parallel", "arbitrary"),
            vmem_limit_bytes=vmem_limit),
    )(x, ln_g, ln_b, w_out)


# ----------------------------------------------------------------------------
# Glue: positional encoding, parameter init, full forward
# ----------------------------------------------------------------------------
def positional_encoding_table(T, H):
    pos = jnp.arange(T, dtype=jnp.float32)[:, None]
    div = jnp.exp(jnp.arange(0, H, 2, dtype=jnp.float32) * -(math.log(10000.0) / H))
    sin = jnp.sin(pos * div)
    cos = jnp.cos(pos * div)
    return jnp.stack([sin, cos], axis=-1).reshape(T, H)   # pe[:,0::2]=sin, 1::2=cos


def init_decoder_params(key, num_layers, H, FF, trg_size, wdtype=jnp.bfloat16):
    def w(k, shape):
        return (0.05 * jax.random.normal(k, shape, jnp.float32)).astype(wdtype)

    def layer_params(k):
        ks = jax.random.split(k, 12)
        return {
            # [Wk_self, Wv_self, Wk_cross, Wv_cross] (hoisted K/V projections)
            'kv_w': w(ks[0], (4, H, H)),
            'kv_b': 0.05 * jax.random.normal(ks[1], (4, H), jnp.float32),
            # [Wq_self, Wo_self, Wq_cross, Wo_cross]
            'qo_w': w(ks[2], (4, H, H)),
            'qo_b': 0.05 * jax.random.normal(ks[3], (4, H), jnp.float32),
            # x_layer_norm (pre self-attn)
            'ln0_g': 1.0 + 0.01 * jax.random.normal(ks[4], (1, H), jnp.float32),
            'ln0_b': 0.01 * jax.random.normal(ks[5], (1, H), jnp.float32),
            # [dec_layer_norm, ffn layer_norm]
            'ln_g': 1.0 + 0.01 * jax.random.normal(ks[6], (2, H), jnp.float32),
            'ln_b': 0.01 * jax.random.normal(ks[7], (2, H), jnp.float32),
            'w1': w(ks[8], (H, FF)),
            'b1': 0.05 * jax.random.normal(ks[9], (1, FF), jnp.float32),
            'w2': w(ks[10], (FF, H)),
            'b2': 0.05 * jax.random.normal(ks[11], (1, H), jnp.float32),
        }

    keys = jax.random.split(key, num_layers + 1)
    return {
        'layers': [layer_params(keys[i]) for i in range(num_layers)],
        'final_ln_g': jnp.ones((1, H), jnp.float32),
        'final_ln_b': jnp.zeros((1, H), jnp.float32),
        'w_out': w(keys[-1], (H, trg_size)),
    }


def transformer_decoder_forward(params, trg_embed, encoder_output, src_mask,
                                trg_mask, num_heads, tq=128, tv=256):
    assert trg_mask is not None, 'trg_mask required for Transformer'
    B, T, H = trg_embed.shape
    V = params['w_out'].shape[-1]
    vmem_limit = _vmem_limit_bytes()

    # Positional encoding + emb_dropout (identity at inference) -- trivial glue.
    x = trg_embed + positional_encoding_table(T, H)[None, :, :]
    # Source mask -> additive f32 bias, computed once and reused by all layers.
    src_bias = jnp.where(src_mask > 0, 0.0, NEG_INF).astype(jnp.float32)

    if trg_mask.ndim == 4:
        # TODO(synk): 4-D trg_mask padding_mask branch (additional padding mask
        # in self-attention) is not wired into the kernel; only the causal
        # subsequent mask is applied (matches the 3-D path exactly).
        pass

    tq = min(tq, T)
    assert T % tq == 0 and (tq % 8 == 0 or tq == T)
    tv = min(tv, V)
    assert V % tv == 0 and (tv % 128 == 0 or tv == V)

    for lp in params['layers']:
        x = decoder_layer(x, encoder_output, src_bias, lp, num_heads, tq,
                          vmem_limit)

    if trg_mask.ndim == 3:
        output, x_final = final_projection_logsoftmax(
            x, params['final_ln_g'], params['final_ln_b'], params['w_out'],
            tq, tv, vmem_limit)
    else:
        output, x_final = final_projection_logits(
            x, params['final_ln_g'], params['final_ln_b'], params['w_out'],
            tq, tv, vmem_limit)
    return output, x_final, None, None


# ----------------------------------------------------------------------------
# pure-JAX reference (same math helpers, exact reciprocal, jax.nn.log_softmax)
# ----------------------------------------------------------------------------
def reference_forward(params, trg_embed, encoder_output, src_mask, num_heads):
    B, T, H = trg_embed.shape
    cdt = params['w_out'].dtype
    recip = lambda u: 1.0 / u
    x = trg_embed + positional_encoding_table(T, H)[None]
    src_bias = jnp.where(src_mask > 0, 0.0, NEG_INF).astype(jnp.float32)
    row = jax.lax.broadcasted_iota(jnp.int32, (T, T), 0)
    col = jax.lax.broadcasted_iota(jnp.int32, (T, T), 1)
    causal_bias = jnp.where(row >= col, 0.0, NEG_INF).astype(jnp.float32)[None]

    for lp in params['layers']:
        xn, ks, vs, kc, vc = _kv_math(
            x, encoder_output, lp['ln0_g'], lp['ln0_b'],
            lp['kv_w'][0], lp['kv_b'][0:1], lp['kv_w'][1], lp['kv_b'][1:2],
            lp['kv_w'][2], lp['kv_b'][2:3], lp['kv_w'][3], lp['kv_b'][3:4], cdt)
        h1 = _attention(xn, lp['qo_w'][0], lp['qo_b'][0:1], ks, vs,
                        lp['qo_w'][1], lp['qo_b'][1:2], causal_bias,
                        num_heads, cdt, recip) + x
        h1n = _layer_norm(h1, lp['ln_g'][0:1], lp['ln_b'][0:1])
        h2 = _attention(h1n, lp['qo_w'][2], lp['qo_b'][2:3], kc, vc,
                        lp['qo_w'][3], lp['qo_b'][3:4], src_bias,
                        num_heads, cdt, recip) + h1
        f = _layer_norm(h2, lp['ln_g'][1:2], lp['ln_b'][1:2])
        f = jnp.maximum(_project(f, lp['w1'], lp['b1'], cdt), 0.0)
        x = h2 + _project(f, lp['w2'], lp['b2'], cdt)

    xn_f = _layer_norm(x, params['final_ln_g'], params['final_ln_b'])
    logits = jnp.einsum('btd,dv->btv', xn_f.astype(cdt), params['w_out'],
                        preferred_element_type=jnp.float32)
    return jax.nn.log_softmax(logits, axis=-1), xn_f


# ----------------------------------------------------------------------------
if __name__ == "__main__":
    key = jax.random.PRNGKey(0)
    B, T, S = 2, 16, 12            # batch, target length, source (memory) length
    H, NH, FF, V, L = 64, 4, 128, 256, 2   # hidden, heads, ff, trg_size, layers
    TQ, TV = 8, 128                # query / vocab tiles (grids: nq=2, nv=2)
    # (At real sizes use tq>=256 and tv=256/512 on v6e/v7x, multiples of 128 on v5e.)

    k1, k2, k3 = jax.random.split(key, 3)
    trg_embed = jax.random.normal(k1, (B, T, H), jnp.float32)
    encoder_output = jax.random.normal(k2, (B, S, H), jnp.float32)
    src_mask = jnp.ones((B, 1, S), jnp.float32).at[1, 0, S - 3:].set(0.0)
    trg_mask = jnp.ones((B, 1, T), jnp.float32)    # 3-D -> log-softmax branch

    params = init_decoder_params(k3, L, H, FF, V)

    out, x_final, _, _ = transformer_decoder_forward(
        params, trg_embed, encoder_output, src_mask, trg_mask, NH, tq=TQ, tv=TV)
    jax.block_until_ready((out, x_final))

    ref_out, ref_x = reference_forward(params, trg_embed, encoder_output,
                                       src_mask, NH)
    assert out.shape == (B, T, V) and x_final.shape == (B, T, H)
    assert jnp.allclose(out, ref_out, atol=2e-2, rtol=2e-2)
    assert jnp.allclose(x_final, ref_x, atol=2e-2, rtol=2e-2)
    print("KERNEL_OK")
</pallas_src>

<mosaic_0001>
module attributes {stable_mosaic.version = 11 : i64} {
  func.func @_kv_kernel(%arg0: memref<2x16x64xf32, #tpu.memory_space<vmem>>, %arg1: memref<2x12x64xf32, #tpu.memory_space<vmem>>, %arg2: memref<1x64xf32, #tpu.memory_space<vmem>>, %arg3: memref<1x64xf32, #tpu.memory_space<vmem>>, %arg4: memref<4x64x64xbf16, #tpu.memory_space<vmem>>, %arg5: memref<4x64xf32, #tpu.memory_space<vmem>>, %arg6: memref<2x16x64xbf16, #tpu.memory_space<vmem>>, %arg7: memref<2x16x64xbf16, #tpu.memory_space<vmem>>, %arg8: memref<2x16x64xbf16, #tpu.memory_space<vmem>>, %arg9: memref<2x12x64xbf16, #tpu.memory_space<vmem>>, %arg10: memref<2x12x64xbf16, #tpu.memory_space<vmem>>) attributes {dimension_semantics = [], scalar_prefetch = 0 : i64, scratch_operands = 0 : i64, tpu.core_type = #tpu.core_type<tc>} {
    %c0 = arith.constant 0 : index
    %c0_0 = arith.constant 0 : index
    %c0_1 = arith.constant 0 : index
    %0 = vector.load %arg0[%c0, %c0_0, %c0_1] : memref<2x16x64xf32, #tpu.memory_space<vmem>>, vector<2x16x64xf32>
    %c0_2 = arith.constant 0 : index
    %c0_3 = arith.constant 0 : index
    %c0_4 = arith.constant 0 : index
    %1 = vector.load %arg1[%c0_2, %c0_3, %c0_4] : memref<2x12x64xf32, #tpu.memory_space<vmem>>, vector<2x12x64xf32>
    %c0_5 = arith.constant 0 : index
    %c0_6 = arith.constant 0 : index
    %2 = vector.load %arg2[%c0_5, %c0_6] : memref<1x64xf32, #tpu.memory_space<vmem>>, vector<1x64xf32>
    %c0_7 = arith.constant 0 : index
    %c0_8 = arith.constant 0 : index
    %3 = vector.load %arg3[%c0_7, %c0_8] : memref<1x64xf32, #tpu.memory_space<vmem>>, vector<1x64xf32>
    %c0_9 = arith.constant 0 : index
    %c0_10 = arith.constant 0 : index
    %c0_11 = arith.constant 0 : index
    %4 = vector.load %arg4[%c0_9, %c0_10, %c0_11] : memref<4x64x64xbf16, #tpu.memory_space<vmem>>, vector<1x64x64xbf16>
    %5 = vector.shape_cast %4 : vector<1x64x64xbf16> to vector<64x64xbf16>
    %c0_12 = arith.constant 0 : index
    %c0_13 = arith.constant 0 : index
    %6 = vector.load %arg5[%c0_12, %c0_13] : memref<4x64xf32, #tpu.memory_space<vmem>>, vector<1x64xf32>
    %c1 = arith.constant 1 : index
    %c0_14 = arith.constant 0 : index
    %c0_15 = arith.constant 0 : index
    %7 = vector.load %arg4[%c1, %c0_14, %c0_15] : memref<4x64x64xbf16, #tpu.memory_space<vmem>>, vector<1x64x64xbf16>
    %8 = vector.shape_cast %7 : vector<1x64x64xbf16> to vector<64x64xbf16>
    %c1_16 = arith.constant 1 : index
    %c0_17 = arith.constant 0 : index
    %9 = vector.load %arg5[%c1_16, %c0_17] : memref<4x64xf32, #tpu.memory_space<vmem>>, vector<1x64xf32>
    %c2 = arith.constant 2 : index
    %c0_18 = arith.constant 0 : index
    %c0_19 = arith.constant 0 : index
    %10 = vector.load %arg4[%c2, %c0_18, %c0_19] : memref<4x64x64xbf16, #tpu.memory_space<vmem>>, vector<1x64x64xbf16>
    %11 = vector.shape_cast %10 : vector<1x64x64xbf16> to vector<64x64xbf16>
    %c2_20 = arith.constant 2 : index
    %c0_21 = arith.constant 0 : index
    %12 = vector.load %arg5[%c2_20, %c0_21] : memref<4x64xf32, #tpu.memory_space<vmem>>, vector<1x64xf32>
    %c3 = arith.constant 3 : index
    %c0_22 = arith.constant 0 : index
    %c0_23 = arith.constant 0 : index
    %13 = vector.load %arg4[%c3, %c0_22, %c0_23] : memref<4x64x64xbf16, #tpu.memory_space<vmem>>, vector<1x64x64xbf16>
    %14 = vector.shape_cast %13 : vector<1x64x64xbf16> to vector<64x64xbf16>
    %c3_24 = arith.constant 3 : index
    %c0_25 = arith.constant 0 : index
    %15 = vector.load %arg5[%c3_24, %c0_25] : memref<4x64xf32, #tpu.memory_space<vmem>>, vector<1x64xf32>
    %cst = arith.constant dense<0.000000e+00> : vector<2x16xf32>
    %16 = vector.multi_reduction <add>, %0, %cst [2] : vector<2x16x64xf32> to vector<2x16xf32>
    %17 = vector.shape_cast %16 : vector<2x16xf32> to vector<2x16x1xf32>
    %cst_26 = arith.constant 6.400000e+01 : f32
    %18 = vector.broadcast %cst_26 : f32 to vector<2x16x1xf32>
    %19 = arith.divf %17, %18 : vector<2x16x1xf32>
    %20 = vector.broadcast %19 : vector<2x16x1xf32> to vector<2x16x64xf32>
    %21 = arith.subf %0, %20 : vector<2x16x64xf32>
    %22 = arith.mulf %21, %21 : vector<2x16x64xf32>
    %cst_27 = arith.constant dense<0.000000e+00> : vector<2x16xf32>
    %23 = vector.multi_reduction <add>, %22, %cst_27 [2] : vector<2x16x64xf32> to vector<2x16xf32>
    %24 = vector.shape_cast %23 : vector<2x16xf32> to vector<2x16x1xf32>
    %cst_28 = arith.constant 6.400000e+01 : f32
    %25 = vector.broadcast %cst_28 : f32 to vector<2x16x1xf32>
    %26 = arith.divf %24, %25 : vector<2x16x1xf32>
    %27 = vector.broadcast %19 : vector<2x16x1xf32> to vector<2x16x64xf32>
    %28 = arith.subf %0, %27 : vector<2x16x64xf32>
    %cst_29 = arith.constant 9.99999997E-7 : f32
    %29 = vector.broadcast %cst_29 : f32 to vector<2x16x1xf32>
    %30 = arith.addf %26, %29 : vector<2x16x1xf32>
    %31 = math.rsqrt %30 : vector<2x16x1xf32>
    %32 = vector.broadcast %31 : vector<2x16x1xf32> to vector<2x16x64xf32>
    %33 = arith.mulf %28, %32 : vector<2x16x64xf32>
    %34 = vector.shape_cast %2 : vector<1x64xf32> to vector<1x1x64xf32>
    %35 = vector.broadcast %34 : vector<1x1x64xf32> to vector<2x16x64xf32>
    %36 = arith.mulf %33, %35 : vector<2x16x64xf32>
    %37 = vector.shape_cast %3 : vector<1x64xf32> to vector<1x1x64xf32>
    %38 = vector.broadcast %37 : vector<1x1x64xf32> to vector<2x16x64xf32>
    %39 = arith.addf %36, %38 : vector<2x16x64xf32>
    %40 = arith.truncf %39 : vector<2x16x64xf32> to vector<2x16x64xbf16>
    "tpu.trace_start"() <{level = 10 : i32, message = "bsd,de->bse"}> : () -> ()
    %cst_30 = arith.constant dense<0.000000e+00> : vector<2x16x64xf32>
    %41 = tpu.matmul %40, %5, %cst_30 {dimension_numbers = #tpu.dot_dimension_numbers<[2], [0], [0, 1], [1], [0, 0, 0, 1, 1, 1], [], []>} : vector<2x16x64xbf16>, vector<64x64xbf16>, vector<2x16x64xf32> -> vector<2x16x64xf32>
    "tpu.trace_stop"() : () -> ()
    %42 = vector.shape_cast %6 : vector<1x64xf32> to vector<1x1x64xf32>
    %43 = vector.broadcast %42 : vector<1x1x64xf32> to vector<2x16x64xf32>
    %44 = arith.addf %41, %43 : vector<2x16x64xf32>
    %45 = arith.truncf %44 : vector<2x16x64xf32> to vector<2x16x64xbf16>
    "tpu.trace_start"() <{level = 10 : i32, message = "bsd,de->bse"}> : () -> ()
    %cst_31 = arith.constant dense<0.000000e+00> : vector<2x16x64xf32>
    %46 = tpu.matmul %40, %8, %cst_31 {dimension_numbers = #tpu.dot_dimension_numbers<[2], [0], [0, 1], [1], [0, 0, 0, 1, 1, 1], [], []>} : vector<2x16x64xbf16>, vector<64x64xbf16>, vector<2x16x64xf32> -> vector<2x16x64xf32>
    "tpu.trace_stop"() : () -> ()
    %47 = vector.shape_cast %9 : vector<1x64xf32> to vector<1x1x64xf32>
    %48 = vector.broadcast %47 : vector<1x1x64xf32> to vector<2x16x64xf32>
    %49 = arith.addf %46, %48 : vector<2x16x64xf32>
    %50 = arith.truncf %49 : vector<2x16x64xf32> to vector<2x16x64xbf16>
    %51 = arith.truncf %1 : vector<2x12x64xf32> to vector<2x12x64xbf16>
    "tpu.trace_start"() <{level = 10 : i32, message = "bsd,de->bse"}> : () -> ()
    %cst_32 = arith.constant dense<0.000000e+00> : vector<2x12x64xf32>
    %52 = tpu.matmul %51, %11, %cst_32 {dimension_numbers = #tpu.dot_dimension_numbers<[2], [0], [0, 1], [1], [0, 0, 0, 1, 1, 1], [], []>} : vector<2x12x64xbf16>, vector<64x64xbf16>, vector<2x12x64xf32> -> vector<2x12x64xf32>
    "tpu.trace_stop"() : () -> ()
    %53 = vector.shape_cast %12 : vector<1x64xf32> to vector<1x1x64xf32>
    %54 = vector.broadcast %53 : vector<1x1x64xf32> to vector<2x12x64xf32>
    %55 = arith.addf %52, %54 : vector<2x12x64xf32>
    %56 = arith.truncf %55 : vector<2x12x64xf32> to vector<2x12x64xbf16>
    %57 = arith.truncf %1 : vector<2x12x64xf32> to vector<2x12x64xbf16>
    "tpu.trace_start"() <{level = 10 : i32, message = "bsd,de->bse"}> : () -> ()
    %cst_33 = arith.constant dense<0.000000e+00> : vector<2x12x64xf32>
    %58 = tpu.matmul %57, %14, %cst_33 {dimension_numbers = #tpu.dot_dimension_numbers<[2], [0], [0, 1], [1], [0, 0, 0, 1, 1, 1], [], []>} : vector<2x12x64xbf16>, vector<64x64xbf16>, vector<2x12x64xf32> -> vector<2x12x64xf32>
    "tpu.trace_stop"() : () -> ()
    %59 = vector.shape_cast %15 : vector<1x64xf32> to vector<1x1x64xf32>
    %60 = vector.broadcast %59 : vector<1x1x64xf32> to vector<2x12x64xf32>
    %61 = arith.addf %58, %60 : vector<2x12x64xf32>
    %62 = arith.truncf %61 : vector<2x12x64xf32> to vector<2x12x64xbf16>
    %c0_34 = arith.constant 0 : index
    %c0_35 = arith.constant 0 : index
    %c0_36 = arith.constant 0 : index
    %63 = vector.load %arg6[%c0_34, %c0_35, %c0_36] : memref<2x16x64xbf16, #tpu.memory_space<vmem>>, vector<2x16x64xbf16>
    tpu.vector_store %arg6[%c0_34, %c0_35, %c0_36], %40 {strides = array<i32>} : memref<2x16x64xbf16, #tpu.memory_space<vmem>>, vector<2x16x64xbf16>,
    %c0_37 = arith.constant 0 : index
    %c0_38 = arith.constant 0 : index
    %c0_39 = arith.constant 0 : index
    %64 = vector.load %arg7[%c0_37, %c0_38, %c0_39] : memref<2x16x64xbf16, #tpu.memory_space<vmem>>, vector<2x16x64xbf16>
    tpu.vector_store %arg7[%c0_37, %c0_38, %c0_39], %45 {strides = array<i32>} : memref<2x16x64xbf16, #tpu.memory_space<vmem>>, vector<2x16x64xbf16>,
    %c0_40 = arith.constant 0 : index
    %c0_41 = arith.constant 0 : index
    %c0_42 = arith.constant 0 : index
    %65 = vector.load %arg8[%c0_40, %c0_41, %c0_42] : memref<2x16x64xbf16, #tpu.memory_space<vmem>>, vector<2x16x64xbf16>
    tpu.vector_store %arg8[%c0_40, %c0_41, %c0_42], %50 {strides = array<i32>} : memref<2x16x64xbf16, #tpu.memory_space<vmem>>, vector<2x16x64xbf16>,
    %c0_43 = arith.constant 0 : index
    %c0_44 = arith.constant 0 : index
    %c0_45 = arith.constant 0 : index
    %66 = vector.load %arg9[%c0_43, %c0_44, %c0_45] : memref<2x12x64xbf16, #tpu.memory_space<vmem>>, vector<2x12x64xbf16>
    tpu.vector_store %arg9[%c0_43, %c0_44, %c0_45], %56 {strides = array<i32>} : memref<2x12x64xbf16, #tpu.memory_space<vmem>>, vector<2x12x64xbf16>,
    %c0_46 = arith.constant 0 : index
    %c0_47 = arith.constant 0 : index
    %c0_48 = arith.constant 0 : index
    %67 = vector.load %arg10[%c0_46, %c0_47, %c0_48] : memref<2x12x64xbf16, #tpu.memory_space<vmem>>, vector<2x12x64xbf16>
    tpu.vector_store %arg10[%c0_46, %c0_47, %c0_48], %62 {strides = array<i32>} : memref<2x12x64xbf16, #tpu.memory_space<vmem>>, vector<2x12x64xbf16>,
    return
  }
}

</mosaic_0001>

<llo_original>
// kernel: tpu_custom_call.1
$region0: #{tpu_custom_call.1}
  #allocation0 [shape = 'u32[]', space=smem, size = 0x4, offset = 0x4, fixed_abs, tag = 'smem constant byte address 0x4 - core index']
  #allocation1 [shape = 'u32[144,128]{1,0:T(1,128)}', space=vmem, size = 0x12000, scoped, tag = 'internal scratch']
  %s0 = inlined_call_operand.vmem [shape: f32[2,16,64], index: 0, kind: input, shape index: {}]
  %s1 = inlined_call_operand.vmem [shape: f32[2,12,64], index: 1, kind: input, shape index: {}]
  %s2 = inlined_call_operand.vmem [shape: f32[1,64], index: 2, kind: input, shape index: {}]
  %s3 = inlined_call_operand.vmem [shape: f32[1,64], index: 3, kind: input, shape index: {}]
  %s4 = inlined_call_operand.hbm [shape: bf16[4,64,64], index: 4, kind: input, shape index: {}]
  %s5 = inlined_call_operand.vmem [shape: f32[4,64], index: 5, kind: input, shape index: {}]
  %s6 = inlined_call_operand.hbm [shape: bf16[2,16,64], index: 6, kind: output, shape index: {0}]
  %s7 = inlined_call_operand.hbm [shape: bf16[2,16,64], index: 7, kind: output, shape index: {1}]
  %s8 = inlined_call_operand.hbm [shape: bf16[2,16,64], index: 8, kind: output, shape index: {2}]
  %s9 = inlined_call_operand.vmem [shape: bf16[2,12,64], index: 9, kind: output, shape index: {3}]
  %s10 = inlined_call_operand.vmem [shape: bf16[2,12,64], index: 10, kind: output, shape index: {4}]
  %11 = xla_tuple %s6, %s7, %s8, %s9, %s10
  %s12 = sld [smem:[#allocation0]]
  $region70: #{tpu_custom_call.1} parent=0
    _
  %s14 = ssub.s32 1, %s12
  %s15 = scalar_select 0, %s14, %s12
  $region1: #{tpu_custom_call.1} parent=0
    #allocation2 [shape = 'u8[65536]{0}', space=vmem, size = 0x10000, scoped, tag = 'input window, operand 4, single buffered']
    #allocation3 [shape = 's32[1]{0}', space=sflag, size = 0x4, scoped, tag = 'scoped memory for tpu_custom_call.1']
    #allocation4 [shape = 's32[1]{0}', space=sflag, size = 0x4, scoped, tag = 'scoped memory for tpu_custom_call.1']
    #allocation5 [shape = 'u8[8192]{0}', space=vmem, size = 0x2000, scoped, tag = 'output window, operand 0, single buffered']
    #allocation6 [shape = 'u8[8192]{0}', space=vmem, size = 0x2000, scoped, tag = 'output window, operand 1, single buffered']
    #allocation7 [shape = 's32[1]{0}', space=sflag, size = 0x4, scoped, tag = 'scoped memory for tpu_custom_call.1']
    #allocation8 [shape = 'u8[8192]{0}', space=vmem, size = 0x2000, scoped, tag = 'output window, operand 2, single buffered']
    %16 = vsyncpa [#allocation3], 0
    %17 = vsyncpa [#allocation4], 0
    %18 = vsyncpa [#allocation7], 0
    // Predicated region
    $region2: #{tpu_custom_call.1} parent=1 // pred_check
      _
    $region3: #{tpu_custom_call.1} parent=1 // pred_check_branch
      %20 = sbr.rel (0) target = $region5
    $region4: #{tpu_custom_call.1} parent=1 // pred_region
      _
    $region5: #{tpu_custom_call.1} parent=1 // pred_fallthru
      _
    // Predicated region
    $region6: #{tpu_custom_call.1} parent=1 // pred_check
      _
    $region7: #{tpu_custom_call.1} parent=1 // pred_check_branch
      %22 = sbr.rel (0) target = $region9
    $region8: #{tpu_custom_call.1} parent=1 // pred_region
      _
    $region9: #{tpu_custom_call.1} parent=1 // pred_fallthru
      _
    // Predicated region
    $region10: #{tpu_custom_call.1} parent=1 // pred_check
      _
    $region11: #{tpu_custom_call.1} parent=1 // pred_check_branch
      %24 = sbr.rel (0) target = $region13
    $region12: #{tpu_custom_call.1} parent=1 // pred_region
      _
    $region13: #{tpu_custom_call.1} parent=1 // pred_fallthru
      _
    // Predicated region
    $region14: #{tpu_custom_call.1} parent=1 // pred_check
      _
    $region15: #{tpu_custom_call.1} parent=1 // pred_check_branch
      %26 = sbr.rel (0) target = $region17
    $region16: #{tpu_custom_call.1} parent=1 // pred_region
      _
    $region17: #{tpu_custom_call.1} parent=1 // pred_fallthru
      _
    // Predicated region
    $region18: #{tpu_custom_call.1} parent=1 // pred_check
      _
    $region19: #{tpu_custom_call.1} parent=1 // pred_check_branch
      %28 = sbr.rel (0) target = $region21
    $region20: #{tpu_custom_call.1} parent=1 // pred_region
      %s30 = ssub.s32 2048, 2048
      %31 = vsyncadd [#allocation3], %s30
      %s32 = sshll.u32 [#allocation2], 4
      %s33 = int_to_ptr.vmem [resolvable:$true] %s32
      %38 = dma.hbm_to_vmem [thread:$0]  %s4, 2048, %s33, [#allocation3], 64, 64, 4
    $region21: #{tpu_custom_call.1} parent=1 // pred_fallthru
      _
    // Predicated region
    $region22: #{tpu_custom_call.1} parent=1 // pred_check
      _
    $region23: #{tpu_custom_call.1} parent=1 // pred_check_branch
      %40 = sbr.rel (0) target = $region25
    $region24: #{tpu_custom_call.1} parent=1 // pred_region
      _
    $region25: #{tpu_custom_call.1} parent=1 // pred_fallthru
      _
    // Predicated region
    $region26: #{tpu_custom_call.1} parent=1 // pred_check
      _
    $region27: #{tpu_custom_call.1} parent=1 // pred_check_branch
      %42 = sbr.rel (0) target = $region29
    $region28: #{tpu_custom_call.1} parent=1 // pred_region
      %43 = dma.done [#allocation3], 2048
    $region29: #{tpu_custom_call.1} parent=1 // pred_fallthru
      _
    %v45 = vld [vmem:[%s0] sm:$0xff]
    %v46 = vld [vmem:[%s0 + $0x8] sm:$0xff]
    %v47 = vld [vmem:[%s0 + $0x10] sm:$0xff]
    %v48 = vld [vmem:[%s0 + $0x18] sm:$0xff]
    %v49 = vld [vmem:[%s1] sm:$0xff]
    %v50 = vld [vmem:[%s1 + $0x8] sm:$0xf]
    %v51 = vld [vmem:[%s1 + $0x10] sm:$0xff]
    %v52 = vld [vmem:[%s1 + $0x18] sm:$0xf]
    %v53 = vld [vmem:[%s2] sm:$0x1]
    %v54 = vld [vmem:[%s3] sm:$0x1]
    %v55 = vld [vmem:[#allocation2] sm:$0xf]
    %v56 = vld [vmem:[#allocation2 + $0x4] sm:$0xf]
    %v57 = vld [vmem:[#allocation2 + $0x8] sm:$0xf]
    %v58 = vld [vmem:[#allocation2 + $0xc] sm:$0xf]
    %v59 = vld [vmem:[#allocation2 + $0x10] sm:$0xf]
    %v60 = vld [vmem:[#allocation2 + $0x14] sm:$0xf]
    %v61 = vld [vmem:[#allocation2 + $0x18] sm:$0xf]
    %v62 = vld [vmem:[#allocation2 + $0x1c] sm:$0xf]
    %v63 = vld [vmem:[%s5] sm:$0x1]
    %s64 = scalar_lea.vmem [#allocation2], 32
    %v65 = vld [vmem:[%s64] sm:$0xf]
    %v66 = vld [vmem:[%s64 + $0x4] sm:$0xf]
    %v67 = vld [vmem:[%s64 + $0x8] sm:$0xf]
    %v68 = vld [vmem:[%s64 + $0xc] sm:$0xf]
    %v69 = vld [vmem:[%s64 + $0x10] sm:$0xf]
    %v70 = vld [vmem:[%s64 + $0x14] sm:$0xf]
    %v71 = vld [vmem:[%s64 + $0x18] sm:$0xf]
    %v72 = vld [vmem:[%s64 + $0x1c] sm:$0xf]
    %v73 = vld [vmem:[%s5 + $0x1] sm:$0x1]
    %s74 = scalar_lea.vmem [#allocation2], 64
    %v75 = vld [vmem:[%s74] sm:$0xf]
    %v76 = vld [vmem:[%s74 + $0x4] sm:$0xf]
    %v77 = vld [vmem:[%s74 + $0x8] sm:$0xf]
    %v78 = vld [vmem:[%s74 + $0xc] sm:$0xf]
    %v79 = vld [vmem:[%s74 + $0x10] sm:$0xf]
    %v80 = vld [vmem:[%s74 + $0x14] sm:$0xf]
    %v81 = vld [vmem:[%s74 + $0x18] sm:$0xf]
    %v82 = vld [vmem:[%s74 + $0x1c] sm:$0xf]
    %v83 = vld [vmem:[%s5 + $0x2] sm:$0x1]
    %s84 = scalar_lea.vmem [#allocation2], 96
    %v85 = vld [vmem:[%s84] sm:$0xf]
    %v86 = vld [vmem:[%s84 + $0x4] sm:$0xf]
    %v87 = vld [vmem:[%s84 + $0x8] sm:$0xf]
    %v88 = vld [vmem:[%s84 + $0xc] sm:$0xf]
    %v89 = vld [vmem:[%s84 + $0x10] sm:$0xf]
    %v90 = vld [vmem:[%s84 + $0x14] sm:$0xf]
    %v91 = vld [vmem:[%s84 + $0x18] sm:$0xf]
    %v92 = vld [vmem:[%s84 + $0x1c] sm:$0xf]
    %v93 = vld [vmem:[%s5 + $0x3] sm:$0x1]
    %vm94 = vcmask 523264
    %v95 = vsel %vm94, %v45, 0.0
    %96 = vadd.xlane.f32.xlu0 %v95
    %v97 = vpop.xlane.xlu0 %96
    %v98 = vsel %vm94, %v46, 0.0
    %99 = vadd.xlane.f32.xlu0 %v98
    %v100 = vpop.xlane.xlu0 %99
    %v101 = vsel %vm94, %v47, 0.0
    %102 = vadd.xlane.f32.xlu0 %v101
    %v103 = vpop.xlane.xlu0 %102
    %v104 = vsel %vm94, %v48, 0.0
    %105 = vadd.xlane.f32.xlu0 %v104
    %v106 = vpop.xlane.xlu0 %105
    %v107 = vrcp.pop 64.0
    %v108 = vmul.f32 %v97, %v107
    %v109 = vmul.f32 %v100, %v107
    %v110 = vmul.f32 %v103, %v107
    %v111 = vmul.f32 %v106, %v107
    %v112 = vsub.f32 %v45, %v108
    %v113 = vsub.f32 %v46, %v109
    %v114 = vsub.f32 %v47, %v110
    %v115 = vsub.f32 %v48, %v111
    %v116 = vmul.f32 %v112, %v112
    %v117 = vmul.f32 %v113, %v113
    %v118 = vmul.f32 %v114, %v114
    %v119 = vmul.f32 %v115, %v115
    %v120 = vsel %vm94, %v116, 0.0
    %121 = vadd.xlane.f32.xlu0 %v120
    %v122 = vpop.xlane.xlu0 %121
    %v123 = vsel %vm94, %v117, 0.0
    %124 = vadd.xlane.f32.xlu0 %v123
    %v125 = vpop.xlane.xlu0 %124
    %v126 = vsel %vm94, %v118, 0.0
    %127 = vadd.xlane.f32.xlu0 %v126
    %v128 = vpop.xlane.xlu0 %127
    %v129 = vsel %vm94, %v119, 0.0
    %130 = vadd.xlane.f32.xlu0 %v129
    %v131 = vpop.xlane.xlu0 %130
    %v132 = vmul.f32 %v122, %v107
    %v133 = vmul.f32 %v125, %v107
    %v134 = vmul.f32 %v128, %v107
    %v135 = vmul.f32 %v131, %v107
    %v136 = vadd.f32 %v132, 1e-06
    %v137 = vadd.f32 %v133, 1e-06
    %v138 = vadd.f32 %v134, 1e-06
    %v139 = vadd.f32 %v135, 1e-06
    %v140 = vrsqrt.pop %v136
    %v141 = vrsqrt.pop %v137
    %v142 = vrsqrt.pop %v138
    %v143 = vrsqrt.pop %v139
    %v144 = vmul.f32 %v112, %v140
    %v145 = vmul.f32 %v113, %v141
    %v146 = vmul.f32 %v114, %v142
    %v147 = vmul.f32 %v115, %v143
    %v149 = vlaneseq
    %v150 = vshrl.u32 %v149, 7
    %v151 = vsub.s32 0, %v150
    %v152 = vrot.slane %v53, %v151
    %v154 = vmul.f32 %v144, %v152
    %v155 = vmul.f32 %v145, %v152
    %v156 = vmul.f32 %v146, %v152
    %v157 = vmul.f32 %v147, %v152
    %v159 = vlaneseq
    %v160 = vshrl.u32 %v159, 7
    %v161 = vsub.s32 0, %v160
    %v162 = vrot.slane %v54, %v161
    %v164 = vadd.f32 %v154, %v162
    %v165 = vadd.f32 %v155, %v162
    %v166 = vadd.f32 %v156, %v162
    %v167 = vadd.f32 %v157, %v162
    %v168 = vpack.c.bf16 %v165, %v164
    %v169 = vpack.c.bf16 %v167, %v166
    %v170 = vlaneseq
    %v171 = vshrl.u32 %v170, 7
    %v172 = vsub.s32 0, %v171
    %v173 = vrot.slane %v63, %v172
    %v182 = vunpack.c.l.b16 %v55
    %v183 = vunpack.c.l.b16 %v56
    %v184 = vunpack.c.l.b16 %v57
    %v185 = vunpack.c.l.b16 %v58
    %v186 = vunpack.c.l.b16 %v59
    %v187 = vunpack.c.l.b16 %v60
    %v188 = vunpack.c.l.b16 %v61
    %v189 = vunpack.c.l.b16 %v62
    %v190 = vpack.c.b16 %v183, %v182
    %v191 = vpack.c.b16 %v185, %v184
    %v192 = vpack.c.b16 %v187, %v186
    %v193 = vpack.c.b16 %v189, %v188
    %v199 = vsel %vm94, %v168, 0
    %v202 = vsel %vm94, %v169, 0
    %204 = vmatprep.subr.bf16.mxu0 0
    %205 = vmatpush1.bf16.msra.mxu0 0
    %206 = vmatprep.subr.bf16.mxu0 0
    %207 = vmatpush1.bf16.msra.mxu0 0
    %208 = vmatprep.subr.bf16.mxu0 0
    %209 = vmatpush1.bf16.msra.mxu0 0
    %210 = vmatprep.subr.bf16.mxu0 0
    %211 = vmatpush1.bf16.msra.mxu0 0
    %212 = vmatprep.subr.bf16.mxu0 0
    %213 = vmatpush1.bf16.msra.mxu0 %v193
    %214 = vmatprep.subr.bf16.mxu0 0
    %215 = vmatpush1.bf16.msra.mxu0 %v192
    %216 = vmatprep.subr.bf16.mxu0 0
    %217 = vmatpush1.bf16.msra.mxu0 %v191
    %218 = vmatprep.subr.bf16.mxu0 0
    %219 = vmatpush1.bf16.msra.mxu0 %v190
    %220 = vmatprep.subr.bf16.mxu0 0
    %221 = vmatpush2.bf16.msra.mxu0 0
    %222 = vmatprep.subr.bf16.mxu0 0
    %223 = vmatpush2.bf16.msra.mxu0 0
    %224 = vmatprep.subr.bf16.mxu0 0
    %225 = vmatpush2.bf16.msra.mxu0 0
    %226 = vmatprep.subr.bf16.mxu0 0
    %227 = vmatpush2.bf16.msra.mxu0 0
    %228 = vmatprep.subr.bf16.mxu0 0
    %229 = vmatpush2.bf16.msra.mxu0 0
    %230 = vmatprep.subr.bf16.mxu0 0
    %231 = vmatpush2.bf16.msra.mxu0 0
    %232 = vmatprep.subr.bf16.mxu0 0
    %233 = vmatpush2.bf16.msra.mxu0 0
    %234 = vmatprep.subr.bf16.mxu0 0
    %235 = vmatpush2.bf16.msra.mxu0 0
    %236 = vmatprep.mubr.bf16.mxu0 0
    %237 = vmatmul.mubr.bf16.gmra.mxu0 %v199
    %v238 = vpop.f32.mrf.mxu0
    %v239 = vadd.f32 %v173, %v238
    %v240 = vpop.f32.mrf.mxu0
    %v241 = vpop.f32.mrf.mxu0
    %v242 = vadd.f32 %v173, %v241
    %v243 = vpop.f32.mrf.mxu0
    %244 = vmatprep.mubr.bf16.mxu0 0
    %245 = vmatmul.mubr.bf16.gmra.mxu0 %v202
    %v246 = vpop.f32.mrf.mxu0
    %v247 = vadd.f32 %v173, %v246
    %v248 = vpop.f32.mrf.mxu0
    %v249 = vpop.f32.mrf.mxu0
    %v250 = vadd.f32 %v173, %v249
    %v251 = vpop.f32.mrf.mxu0
    %252 = vdwg.mxu0
    %v253 = vpack.c.bf16 %v242, %v239
    %v254 = vpack.c.bf16 %v250, %v247
    %v255 = vlaneseq
    %v256 = vshrl.u32 %v255, 7
    %v257 = vsub.s32 0, %v256
    %v258 = vrot.slane %v73, %v257
    %v267 = vunpack.c.l.b16 %v65
    %v268 = vunpack.c.l.b16 %v66
    %v269 = vunpack.c.l.b16 %v67
    %v270 = vunpack.c.l.b16 %v68
    %v271 = vunpack.c.l.b16 %v69
    %v272 = vunpack.c.l.b16 %v70
    %v273 = vunpack.c.l.b16 %v71
    %v274 = vunpack.c.l.b16 %v72
    %v275 = vpack.c.b16 %v268, %v267
    %v276 = vpack.c.b16 %v270, %v269
    %v277 = vpack.c.b16 %v272, %v271
    %v278 = vpack.c.b16 %v274, %v273
    %283 = vmatprep.subr.bf16.mxu0 0
    %284 = vmatpush1.bf16.msra.mxu0 0
    %285 = vmatprep.subr.bf16.mxu0 0
    %286 = vmatpush1.bf16.msra.mxu0 0
    %287 = vmatprep.subr.bf16.mxu0 0
    %288 = vmatpush1.bf16.msra.mxu0 0
    %289 = vmatprep.subr.bf16.mxu0 0
    %290 = vmatpush1.bf16.msra.mxu0 0
    %291 = vmatprep.subr.bf16.mxu0 0
    %292 = vmatpush1.bf16.msra.mxu0 %v278
    %293 = vmatprep.subr.bf16.mxu0 0
    %294 = vmatpush1.bf16.msra.mxu0 %v277
    %295 = vmatprep.subr.bf16.mxu0 0
    %296 = vmatpush1.bf16.msra.mxu0 %v276
    %297 = vmatprep.subr.bf16.mxu0 0
    %298 = vmatpush1.bf16.msra.mxu0 %v275
    %299 = vmatprep.subr.bf16.mxu0 0
    %300 = vmatpush2.bf16.msra.mxu0 0
    %301 = vmatprep.subr.bf16.mxu0 0
    %302 = vmatpush2.bf16.msra.mxu0 0
    %303 = vmatprep.subr.bf16.mxu0 0
    %304 = vmatpush2.bf16.msra.mxu0 0
    %305 = vmatprep.subr.bf16.mxu0 0
    %306 = vmatpush2.bf16.msra.mxu0 0
    %307 = vmatprep.subr.bf16.mxu0 0
    %308 = vmatpush2.bf16.msra.mxu0 0
    %309 = vmatprep.subr.bf16.mxu0 0
    %310 = vmatpush2.bf16.msra.mxu0 0
    %311 = vmatprep.subr.bf16.mxu0 0
    %312 = vmatpush2.bf16.msra.mxu0 0
    %313 = vmatprep.subr.bf16.mxu0 0
    %314 = vmatpush2.bf16.msra.mxu0 0
    %315 = vmatprep.mubr.bf16.mxu0 0
    %316 = vmatmul.mubr.bf16.gmra.mxu0 %v199
    %v317 = vpop.f32.mrf.mxu0
    %v318 = vadd.f32 %v258, %v317
    %v319 = vpop.f32.mrf.mxu0
    %v320 = vpop.f32.mrf.mxu0
    %v321 = vadd.f32 %v258, %v320
    %v322 = vpop.f32.mrf.mxu0
    %323 = vmatprep.mubr.bf16.mxu0 0
    %324 = vmatmul.mubr.bf16.gmra.mxu0 %v202
    %v325 = vpop.f32.mrf.mxu0
    %v326 = vadd.f32 %v258, %v325
    %v327 = vpop.f32.mrf.mxu0
    %v328 = vpop.f32.mrf.mxu0
    %v329 = vadd.f32 %v258, %v328
    %v330 = vpop.f32.mrf.mxu0
    %331 = vdwg.mxu0
    %v332 = vpack.c.bf16 %v321, %v318
    %v333 = vpack.c.bf16 %v329, %v326
    %v334 = vpack.c.bf16 %v50, %v49
    %v335 = vpack.c.bf16 %v52, %v51
    %v336 = vlaneseq
    %v337 = vshrl.u32 %v336, 7
    %v338 = vsub.s32 0, %v337
    %v339 = vrot.slane %v83, %v338
    %v342 = vcombine.high %v334, %v334
    %v344 = vunpack.c.l.s4 1983009808
    %v345 = vunpack.c.0.s8 %v344
    %v346 = vlaneseq
    %v347 = vshrl.u32 %v346, 7
    %v348 = vsub.s32 %v345, %v347
    %v349 = vrot.slane %v334, %v348
    %v351 = vunpack.c.l.s4 1983009808
    %v352 = vunpack.c.0.s8 %v351
    %v353 = vlaneseq
    %v354 = vshrl.u32 %v353, 7
    %v355 = vsub.s32 %v352, %v354
    %v356 = vrot.slane %v342, %v355
    %v357 = vcombine.high %v349, %v349
    %v358 = vcombine.high %v335, %v335
    %v360 = vunpack.c.l.s4 1983009808
    %v361 = vunpack.c.0.s8 %v360
    %v362 = vlaneseq
    %v363 = vshrl.u32 %v362, 7
    %v364 = vsub.s32 %v361, %v363
    %v365 = vrot.slane %v335, %v364
    %v367 = vunpack.c.l.s4 1983009808
    %v368 = vunpack.c.0.s8 %v367
    %v369 = vlaneseq
    %v370 = vshrl.u32 %v369, 7
    %v371 = vsub.s32 %v368, %v370
    %v372 = vrot.slane %v358, %v371
    %v373 = vcombine.high %v365, %v365
    %v375 = vcombine.high %v339, %v339
    %v376 = vcombine.low %v349, %v357
    %v377 = vcombine.low %v356, %v365
    %v379 = vunpack.c.l.s4 1983009808
    %v380 = vunpack.c.0.s8 %v379
    %v381 = vlaneseq
    %v382 = vshrl.u32 %v381, 7
    %v383 = vsub.s32 %v380, %v382
    %v384 = vrot.slane %v376, %v383
    %v386 = vunpack.c.l.s4 1983009808
    %v387 = vunpack.c.0.s8 %v386
    %v388 = vlaneseq
    %v389 = vshrl.u32 %v388, 7
    %v390 = vsub.s32 %v387, %v389
    %v391 = vrot.slane %v377, %v390
    %v392 = vcombine.low %v384, %v391
    %v393 = vcombine.low %v373, %v372
    %v395 = vunpack.c.l.s4 1983009808
    %v396 = vunpack.c.0.s8 %v395
    %v397 = vlaneseq
    %v398 = vshrl.u32 %v397, 7
    %v399 = vsub.s32 %v396, %v398
    %v400 = vrot.slane %v393, %v399
    %v409 = vunpack.c.l.b16 %v75
    %v410 = vunpack.c.l.b16 %v76
    %v411 = vunpack.c.l.b16 %v77
    %v412 = vunpack.c.l.b16 %v78
    %v413 = vunpack.c.l.b16 %v79
    %v414 = vunpack.c.l.b16 %v80
    %v415 = vunpack.c.l.b16 %v81
    %v416 = vunpack.c.l.b16 %v82
    %v417 = vpack.c.b16 %v410, %v409
    %v418 = vpack.c.b16 %v412, %v411
    %v419 = vpack.c.b16 %v414, %v413
    %v420 = vpack.c.b16 %v416, %v415
    %v425 = vcombine.low %v339, %v375
    %v426 = vcombine.low %v339, %v339
    %v427 = vcombine.low %v375, %v339
    %v432 = vsel %vm94, %v392, 0
    %v435 = vsel %vm94, %v400, 0
    %437 = vmatprep.subr.bf16.mxu0 0
    %438 = vmatpush1.bf16.msra.mxu0 0
    %439 = vmatprep.subr.bf16.mxu0 0
    %440 = vmatpush1.bf16.msra.mxu0 0
    %441 = vmatprep.subr.bf16.mxu0 0
    %442 = vmatpush1.bf16.msra.mxu0 0
    %443 = vmatprep.subr.bf16.mxu0 0
    %444 = vmatpush1.bf16.msra.mxu0 0
    %445 = vmatprep.subr.bf16.mxu0 0
    %446 = vmatpush1.bf16.msra.mxu0 %v420
    %447 = vmatprep.subr.bf16.mxu0 0
    %448 = vmatpush1.bf16.msra.mxu0 %v419
    %449 = vmatprep.subr.bf16.mxu0 0
    %450 = vmatpush1.bf16.msra.mxu0 %v418
    %451 = vmatprep.subr.bf16.mxu0 0
    %452 = vmatpush1.bf16.msra.mxu0 %v417
    %453 = vmatprep.subr.bf16.mxu0 0
    %454 = vmatpush2.bf16.msra.mxu0 0
    %455 = vmatprep.subr.bf16.mxu0 0
    %456 = vmatpush2.bf16.msra.mxu0 0
    %457 = vmatprep.subr.bf16.mxu0 0
    %458 = vmatpush2.bf16.msra.mxu0 0
    %459 = vmatprep.subr.bf16.mxu0 0
    %460 = vmatpush2.bf16.msra.mxu0 0
    %461 = vmatprep.subr.bf16.mxu0 0
    %462 = vmatpush2.bf16.msra.mxu0 0
    %463 = vmatprep.subr.bf16.mxu0 0
    %464 = vmatpush2.bf16.msra.mxu0 0
    %465 = vmatprep.subr.bf16.mxu0 0
    %466 = vmatpush2.bf16.msra.mxu0 0
    %467 = vmatprep.subr.bf16.mxu0 0
    %468 = vmatpush2.bf16.msra.mxu0 0
    %469 = vmatprep.mubr.bf16.mxu0 0
    %470 = vmatmul.mubr.bf16.gmra.mxu0 %v432
    %v471 = vpop.f32.mrf.mxu0
    %v472 = vadd.f32 %v425, %v471
    %v473 = vpop.f32.mrf.mxu0
    %v474 = vpop.f32.mrf.mxu0
    %v475 = vadd.f32 %v426, %v474
    %v476 = vpop.f32.mrf.mxu0
    %477 = vmatprep.mubr.bf16.mxu0 0
    %478 = vmatmul.mubr.bf16.gmra.mxu0 %v435
    %v479 = vpop.f32.mrf.mxu0
    %v480 = vadd.f32 %v427, %v479
    %v481 = vpop.f32.mrf.mxu0
    %v482 = vpop.f32.mrf.mxu0
    %v483 = vpop.f32.mrf.mxu0
    %484 = vdwg.mxu0
    %v488 = vcombine.high %v472, %v472
    %v489 = vcombine.high %v475, %v475
    %v490 = vcombine.high %v480, %v480
    %v492 = vcombine.low %v472, %v488
    %v493 = vcombine.low %v489, %v480
    %v496 = vpack.c.bf16 %v475, %v492
    %v497 = vpack.c.bf16 %v490, %v493
    %v498 = vlaneseq
    %v499 = vshrl.u32 %v498, 7
    %v500 = vsub.s32 0, %v499
    %v501 = vrot.slane %v93, %v500
    %v503 = vcombine.high %v501, %v501
    %v512 = vunpack.c.l.b16 %v85
    %v513 = vunpack.c.l.b16 %v86
    %v514 = vunpack.c.l.b16 %v87
    %v515 = vunpack.c.l.b16 %v88
    %v516 = vunpack.c.l.b16 %v89
    %v517 = vunpack.c.l.b16 %v90
    %v518 = vunpack.c.l.b16 %v91
    %v519 = vunpack.c.l.b16 %v92
    %v520 = vpack.c.b16 %v513, %v512
    %v521 = vpack.c.b16 %v515, %v514
    %v522 = vpack.c.b16 %v517, %v516
    %v523 = vpack.c.b16 %v519, %v518
    %v528 = vcombine.low %v501, %v503
    %v529 = vcombine.low %v501, %v501
    %v530 = vcombine.low %v503, %v501
    %534 = vmatprep.subr.bf16.mxu0 0
    %535 = vmatpush1.bf16.msra.mxu0 0
    %536 = vmatprep.subr.bf16.mxu0 0
    %537 = vmatpush1.bf16.msra.mxu0 0
    %538 = vmatprep.subr.bf16.mxu0 0
    %539 = vmatpush1.bf16.msra.mxu0 0
    %540 = vmatprep.subr.bf16.mxu0 0
    %541 = vmatpush1.bf16.msra.mxu0 0
    %542 = vmatprep.subr.bf16.mxu0 0
    %543 = vmatpush1.bf16.msra.mxu0 %v523
    %544 = vmatprep.subr.bf16.mxu0 0
    %545 = vmatpush1.bf16.msra.mxu0 %v522
    %546 = vmatprep.subr.bf16.mxu0 0
    %547 = vmatpush1.bf16.msra.mxu0 %v521
    %548 = vmatprep.subr.bf16.mxu0 0
    %549 = vmatpush1.bf16.msra.mxu0 %v520
    %550 = vmatprep.subr.bf16.mxu0 0
    %551 = vmatpush2.bf16.msra.mxu0 0
    %552 = vmatprep.subr.bf16.mxu0 0
    %553 = vmatpush2.bf16.msra.mxu0 0
    %554 = vmatprep.subr.bf16.mxu0 0
    %555 = vmatpush2.bf16.msra.mxu0 0
    %556 = vmatprep.subr.bf16.mxu0 0
    %557 = vmatpush2.bf16.msra.mxu0 0
    %558 = vmatprep.subr.bf16.mxu0 0
    %559 = vmatpush2.bf16.msra.mxu0 0
    %560 = vmatprep.subr.bf16.mxu0 0
    %561 = vmatpush2.bf16.msra.mxu0 0
    %562 = vmatprep.subr.bf16.mxu0 0
    %563 = vmatpush2.bf16.msra.mxu0 0
    %564 = vmatprep.subr.bf16.mxu0 0
    %565 = vmatpush2.bf16.msra.mxu0 0
    %566 = vmatprep.mubr.bf16.mxu0 0
    %567 = vmatmul.mubr.bf16.gmra.mxu0 %v432
    %v568 = vpop.f32.mrf.mxu0
    %v569 = vadd.f32 %v528, %v568
    %v570 = vpop.f32.mrf.mxu0
    %v571 = vpop.f32.mrf.mxu0
    %v572 = vadd.f32 %v529, %v571
    %v573 = vpop.f32.mrf.mxu0
    %574 = vmatprep.mubr.bf16.mxu0 0
    %575 = vmatmul.mubr.bf16.gmra.mxu0 %v435
    %v576 = vpop.f32.mrf.mxu0
    %v577 = vadd.f32 %v530, %v576
    %v578 = vpop.f32.mrf.mxu0
    %v579 = vpop.f32.mrf.mxu0
    %v580 = vpop.f32.mrf.mxu0
    %581 = vdwg.mxu0
    %v585 = vcombine.high %v569, %v569
    %v586 = vcombine.high %v572, %v572
    %v587 = vcombine.high %v577, %v577
    %v589 = vcombine.low %v569, %v585
    %v590 = vcombine.low %v586, %v577
    %v593 = vpack.c.bf16 %v572, %v589
    %v594 = vpack.c.bf16 %v587, %v590
    %v597 = vunpack.c.l.b16 %v168
    %v598 = vunpack.c.h.b16 %v168
    %v599 = vunpack.c.l.b16 %v169
    %v600 = vunpack.c.h.b16 %v169
    %v601 = vpack.c.b16 %v597, %v597
    %v602 = vpack.c.b16 %v598, %v598
    %v603 = vpack.c.b16 %v599, %v599
    %v604 = vpack.c.b16 %v600, %v600
    %vm609 = vcmask 519168
    %610 = vst.msk [vmem:[#allocation5] sm:$0xf] %vm609, %v601
    %611 = vst.msk [vmem:[#allocation5 + $0x4] sm:$0xf] %vm609, %v602
    %612 = vst.msk [vmem:[#allocation5 + $0x8] sm:$0xf] %vm609, %v603
    %613 = vst.msk [vmem:[#allocation5 + $0xc] sm:$0xf] %vm609, %v604
    %v616 = vunpack.c.l.b16 %v253
    %v617 = vunpack.c.h.b16 %v253
    %v618 = vunpack.c.l.b16 %v254
    %v619 = vunpack.c.h.b16 %v254
    %v620 = vpack.c.b16 %v616, %v616
    %v621 = vpack.c.b16 %v617, %v617
    %v622 = vpack.c.b16 %v618, %v618
    %v623 = vpack.c.b16 %v619, %v619
    %628 = vst.msk [vmem:[#allocation6] sm:$0xf] %vm609, %v620
    %629 = vst.msk [vmem:[#allocation6 + $0x4] sm:$0xf] %vm609, %v621
    %630 = vst.msk [vmem:[#allocation6 + $0x8] sm:$0xf] %vm609, %v622
    %631 = vst.msk [vmem:[#allocation6 + $0xc] sm:$0xf] %vm609, %v623
    %v634 = vunpack.c.l.b16 %v332
    %v635 = vunpack.c.h.b16 %v332
    %v636 = vunpack.c.l.b16 %v333
    %v637 = vunpack.c.h.b16 %v333
    %v638 = vpack.c.b16 %v634, %v634
    %v639 = vpack.c.b16 %v635, %v635
    %v640 = vpack.c.b16 %v636, %v636
    %v641 = vpack.c.b16 %v637, %v637
    %646 = vst.msk [vmem:[#allocation8] sm:$0xf] %vm609, %v638
    %647 = vst.msk [vmem:[#allocation8 + $0x4] sm:$0xf] %vm609, %v639
    %648 = vst.msk [vmem:[#allocation8 + $0x8] sm:$0xf] %vm609, %v640
    %649 = vst.msk [vmem:[#allocation8 + $0xc] sm:$0xf] %vm609, %v641
    %v652 = vunpack.c.l.b16 %v496
    %v653 = vunpack.c.h.b16 %v496
    %v654 = vunpack.c.l.b16 %v497
    %v655 = vunpack.c.h.b16 %v497
    %v656 = vpack.c.b16 %v652, %v652
    %v657 = vpack.c.b16 %v653, %v653
    %v658 = vpack.c.b16 %v654, %v654
    %v659 = vpack.c.b16 %v655, %v655
    %664 = vst.msk [vmem:[%s9] sm:$0xf] %vm609, %v656
    %vm665 = vcmask 517120
    %666 = vst.msk [vmem:[%s9 + $0x4] sm:$0x3] %vm665, %v657
    %667 = vst.msk [vmem:[%s9 + $0x8] sm:$0xf] %vm609, %v658
    %668 = vst.msk [vmem:[%s9 + $0xc] sm:$0x3] %vm665, %v659
    %v671 = vunpack.c.l.b16 %v593
    %v672 = vunpack.c.h.b16 %v593
    %v673 = vunpack.c.l.b16 %v594
    %v674 = vunpack.c.h.b16 %v594
    %v675 = vpack.c.b16 %v671, %v671
    %v676 = vpack.c.b16 %v672, %v672
    %v677 = vpack.c.b16 %v673, %v673
    %v678 = vpack.c.b16 %v674, %v674
    %683 = vst.msk [vmem:[%s10] sm:$0xf] %vm609, %v675
    %684 = vst.msk [vmem:[%s10 + $0x4] sm:$0x3] %vm665, %v676
    %685 = vst.msk [vmem:[%s10 + $0x8] sm:$0xf] %vm609, %v677
    %686 = vst.msk [vmem:[%s10 + $0xc] sm:$0x3] %vm665, %v678
    // Predicated region
    $region30: #{tpu_custom_call.1} parent=1 // pred_check
      _
    $region31: #{tpu_custom_call.1} parent=1 // pred_check_branch
      %688 = sbr.rel (0) target = $region33
    $region32: #{tpu_custom_call.1} parent=1 // pred_region
      %s690 = ssub.s32 256, 256
      %691 = vsyncadd [#allocation4], %s690
      %s692 = sshll.u32 [#allocation5], 4
      %s693 = int_to_ptr.vmem [resolvable:$true] %s692
      %698 = dma.vmem_to_hbm [thread:$0]  %s693, 256, %s6, [#allocation4], 64, 64, 4
    $region33: #{tpu_custom_call.1} parent=1 // pred_fallthru
      _
    // Predicated region
    $region34: #{tpu_custom_call.1} parent=1 // pred_check
      _
    $region35: #{tpu_custom_call.1} parent=1 // pred_check_branch
      %700 = sbr.rel (0) target = $region37
    $region36: #{tpu_custom_call.1} parent=1 // pred_region
      %s702 = ssub.s32 256, 256
      %703 = vsyncadd [#allocation7], %s702
      %s704 = sshll.u32 [#allocation6], 4
      %s705 = int_to_ptr.vmem [resolvable:$true] %s704
      %710 = dma.vmem_to_hbm [thread:$0]  %s705, 256, %s7, [#allocation7], 64, 64, 4
    $region37: #{tpu_custom_call.1} parent=1 // pred_fallthru
      _
    // Predicated region
    $region38: #{tpu_custom_call.1} parent=1 // pred_check
      _
    $region39: #{tpu_custom_call.1} parent=1 // pred_check_branch
      %712 = sbr.rel (0) target = $region41
    $region40: #{tpu_custom_call.1} parent=1 // pred_region
      %s714 = ssub.s32 256, 256
      %715 = vsyncadd [#allocation7], %s714
      %s716 = sshll.u32 [#allocation8], 4
      %s717 = int_to_ptr.vmem [resolvable:$true] %s716
      %722 = dma.vmem_to_hbm [thread:$0]  %s717, 256, %s8, [#allocation7], 64, 64, 4
    $region41: #{tpu_custom_call.1} parent=1 // pred_fallthru
      _
    // Predicated region
    $region42: #{tpu_custom_call.1} parent=1 // pred_check
      _
    $region43: #{tpu_custom_call.1} parent=1 // pred_check_branch
      %724 = sbr.rel (0) target = $region45
    $region44: #{tpu_custom_call.1} parent=1 // pred_region
      _
    $region45: #{tpu_custom_call.1} parent=1 // pred_fallthru
      _
    // Predicated region
    $region46: #{tpu_custom_call.1} parent=1 // pred_check
      _
    $region47: #{tpu_custom_call.1} parent=1 // pred_check_branch
      %726 = sbr.rel (0) target = $region49
    $region48: #{tpu_custom_call.1} parent=1 // pred_region
      _
    $region49: #{tpu_custom_call.1} parent=1 // pred_fallthru
      _
    // Predicated region
    $region50: #{tpu_custom_call.1} parent=1 // pred_check
      _
    $region51: #{tpu_custom_call.1} parent=1 // pred_check_branch
      %728 = sbr.rel (0) target = $region53
    $region52: #{tpu_custom_call.1} parent=1 // pred_region
      %729 = dma.done [#allocation4], 256
    $region53: #{tpu_custom_call.1} parent=1 // pred_fallthru
      _
    // Predicated region
    $region54: #{tpu_custom_call.1} parent=1 // pred_check
      _
    $region55: #{tpu_custom_call.1} parent=1 // pred_check_branch
      %731 = sbr.rel (0) target = $region57
    $region56: #{tpu_custom_call.1} parent=1 // pred_region
      %732 = dma.done [#allocation7], 256
    $region57: #{tpu_custom_call.1} parent=1 // pred_fallthru
      _
    // Predicated region
    $region58: #{tpu_custom_call.1} parent=1 // pred_check
      _
    $region59: #{tpu_custom_call.1} parent=1 // pred_check_branch
      %734 = sbr.rel (0) target = $region61
    $region60: #{tpu_custom_call.1} parent=1 // pred_region
      %735 = dma.done [#allocation7], 256
    $region61: #{tpu_custom_call.1} parent=1 // pred_fallthru
      _
    // Predicated region
    $region62: #{tpu_custom_call.1} parent=1 // pred_check
      _
    $region63: #{tpu_custom_call.1} parent=1 // pred_check_branch
      %737 = sbr.rel (0) target = $region65
    $region64: #{tpu_custom_call.1} parent=1 // pred_region
      _
    $region65: #{tpu_custom_call.1} parent=1 // pred_fallthru
      _
    // Predicated region
    $region66: #{tpu_custom_call.1} parent=1 // pred_check
      _
    $region67: #{tpu_custom_call.1} parent=1 // pred_check_branch
      %739 = sbr.rel (0) target = $region69
    $region68: #{tpu_custom_call.1} parent=1 // pred_region
      _
    $region69: #{tpu_custom_call.1} parent=1 // pred_fallthru
      _
    %740 = vsyncpa [#allocation3], 1
    %741 = vsyncpa [#allocation4], 1
    %742 = vsyncpa [#allocation7], 1

</llo_original>
